<compile_context>
chip_gen: v6e
topology: v6e:2x2x1
jax: 0.10.0
libtpu: 0.0.40
codegen_flags: <defaults>
</compile_context>

<pallas_src>
import jax
import jax.numpy as jnp
import numpy as np
from jax.experimental import pallas as pl
from jax.experimental.pallas import tpu as pltpu

# --- shapes (consistent with the module) --------------------------------------
B = 2                   # batch
C = 4                   # input image channels
H = W = 16              # spatial
D = 32                  # hidden_dim == transformer.d_model
NUM_QUERIES = 8
NUM_CLASSES = 4         # -> num_classes + 1 = 5 logits
NUM_DEG = 8             # -> num_deg + 1   = 9 direction bins
H3 = 3 * D              # 96: hidden width of quadrant / direction MLPs
HP = 128                # H3 zero-padded to a full vreg of lanes
N = B * NUM_QUERIES     # 16 flattened tokens seen by the head kernel
W1_COLS = 3 * HP        # 384: [head01 slab | quad pre-act | dir pre-act]
OUT_W = 128             # single lane-dense output slab width

NUM_LOGITS = NUM_CLASSES + 1      # 5
NUM_DIRS = NUM_DEG + 1            # 9
COL_LOGITS = 0
COL_BOXES = COL_LOGITS + NUM_LOGITS   # 5
COL_QUAD = COL_BOXES + 4              # 9
COL_DIRS = COL_QUAD + 3               # 12


# --- deterministic parameter init (PyTorch nn.Linear-style uniform) ----------
def linear_params(key, fan_in, fan_out):
    kw, kb = jax.random.split(key)
    bound = 1.0 / float(np.sqrt(fan_in))
    w = jax.random.uniform(kw, (fan_in, fan_out), jnp.float32, -bound, bound)
    b = jax.random.uniform(kb, (1, fan_out), jnp.float32, -bound, bound)
    return w, b


def init_head_params(key):
    ks = jax.random.split(key, 8)
    # class_embed: MLP(D, D, num_classes+1, 1) == single Linear
    wc, bc = linear_params(ks[0], D, NUM_LOGITS)
    # bbox_embed: MLP(D, D, 4, 1) == single Linear
    wb, bb = linear_params(ks[1], D, 4)
    # quadrant_embed: MLP(D, 3D, 3, 2): Linear(D,3D) -> sigmoid -> Linear(3D,3)
    wq0, bq0 = linear_params(ks[2], D, H3)
    wq1, bq1 = linear_params(ks[3], H3, 3)
    # direction_embed: [MLP(D, 3D, num_deg+1, 4)] * num_queries — the SAME
    # module instance repeated, so all queries share one 4-layer MLP.
    wd0, bd0 = linear_params(ks[4], D, H3)
    wd1, bd1 = linear_params(ks[5], H3, H3)
    wd2, bd2 = linear_params(ks[6], H3, H3)
    wd3, bd3 = linear_params(ks[7], H3, NUM_DIRS)
    return (wc, bc, wb, bb, wq0, bq0, wq1, bq1,
            wd0, bd0, wd1, bd1, wd2, bd2, wd3, bd3)


# --- host-side packing of the 16 params into 3 lane-dense slabs ----------------
def pack_head_params(params):
    (wc, bc, wb, bb, wq0, bq0, wq1, bq1,
     wd0, bd0, wd1, bd1, wd2, bd2, wd3, bd3) = params

    # Fused first layer (every head's first matmul consumes x = hs).
    #   cols [0:5)     -> class logits (final)
    #   cols [5:9)     -> bbox pre-sigmoid (final after sigmoid)
    #   cols [9:128)   -> zero (reserved output lanes)
    #   cols [128:256) -> quadrant layer-0 pre-act (96 real + 32 zero-pad)
    #   cols [256:384) -> direction layer-0 pre-act (96 real + 32 zero-pad)
    w1 = jnp.zeros((D, W1_COLS), jnp.float32)
    w1 = w1.at[:, COL_LOGITS:COL_LOGITS + NUM_LOGITS].set(wc)
    w1 = w1.at[:, COL_BOXES:COL_BOXES + 4].set(wb)
    w1 = w1.at[:, HP:HP + H3].set(wq0)
    w1 = w1.at[:, 2 * HP:2 * HP + H3].set(wd0)

    b1 = jnp.zeros((W1_COLS,), jnp.float32)
    b1 = b1.at[COL_LOGITS:COL_LOGITS + NUM_LOGITS].set(bc[0])
    b1 = b1.at[COL_BOXES:COL_BOXES + 4].set(bb[0])
    b1 = b1.at[HP:HP + H3].set(bq0[0])
    b1 = b1.at[2 * HP:2 * HP + H3].set(bd0[0])

    # Deep layers, each padded to 128x128 with ZERO padded rows/cols so the
    # sigmoid(0)=0.5 values living in padded input lanes contribute nothing.
    #   [0] direction layer-1, [1] direction layer-2,
    #   [2] quadrant final (3 cols placed at COL_QUAD),
    #   [3] direction final (9 cols placed at COL_DIRS).
    wdeep = jnp.zeros((4, HP, HP), jnp.float32)
    wdeep = wdeep.at[0, :H3, :H3].set(wd1)
    wdeep = wdeep.at[1, :H3, :H3].set(wd2)
    wdeep = wdeep.at[2, :H3, COL_QUAD:COL_QUAD + 3].set(wq1)
    wdeep = wdeep.at[3, :H3, COL_DIRS:COL_DIRS + NUM_DIRS].set(wd3)

    # Bias slab: row 0 = fused first-layer bias (384 wide),
    # rows 1/2 = direction layer-1/2 biases (first 128 lanes, 96 real),
    # row 3 = fused final-layer bias (first 128 lanes: quad @9:12, dirs @12:21).
    bias = jnp.zeros((4, W1_COLS), jnp.float32)
    bias = bias.at[0, :].set(b1)
    bias = bias.at[1, :H3].set(bd1[0])
    bias = bias.at[2, :H3].set(bd2[0])
    bias = bias.at[3, COL_QUAD:COL_QUAD + 3].set(bq1[0])
    bias = bias.at[3, COL_DIRS:COL_DIRS + NUM_DIRS].set(bd3[0])

    return w1, wdeep, bias


# --- Pallas kernel: all four prediction heads, fused, one grid step ------------
def heads_kernel(x_ref, w1_ref, wdeep_ref, bias_ref, out_ref):
    sig = jax.nn.sigmoid
    x = x_ref[...]                                           # (N, D) f32

    # One fused first-layer matmul for all four heads.
    y1 = jnp.dot(x, w1_ref[...], preferred_element_type=jnp.float32) \
        + bias_ref[0:1, :]                                   # (N, 384)

    head01 = y1[:, 0:HP]          # logits @ [0:5), boxes pre-act @ [5:9), zeros
    q = sig(y1[:, HP:2 * HP])     # quadrant hidden (padded lanes hold 0.5)
    d = sig(y1[:, 2 * HP:3 * HP])  # direction hidden (padded lanes hold 0.5)

    # Direction MLP middle layers (shared by all queries in the original model).
    d = sig(jnp.dot(d, wdeep_ref[0], preferred_element_type=jnp.float32)
            + bias_ref[1:2, 0:HP])
    d = sig(jnp.dot(d, wdeep_ref[1], preferred_element_type=jnp.float32)
            + bias_ref[2:3, 0:HP])

    # Fused final projections land directly in the 128-lane output slab.
    out_pre = (head01
               + jnp.dot(q, wdeep_ref[2], preferred_element_type=jnp.float32)
               + jnp.dot(d, wdeep_ref[3], preferred_element_type=jnp.float32)
               + bias_ref[3:4, 0:HP])                        # (N, 128)

    # Sigmoid only on boxes [5:9) and quadrant [9:12) columns.
    lane = jax.lax.broadcasted_iota(jnp.int32, out_pre.shape, 1)
    need_sig = (lane >= COL_BOXES) & (lane < COL_DIRS)
    out_ref[...] = jnp.where(need_sig, sig(out_pre), out_pre)


def detection_heads(hs_flat, packed):
    """hs_flat: (N, D) f32 -> (logits, boxes, quadrant, directions)."""
    w1, wdeep, bias = packed

    flops = 2 * N * (D * W1_COLS + 4 * HP * HP)
    transcendentals = N * 5 * HP
    bytes_accessed = 4 * (N * D + D * W1_COLS + 4 * HP * HP
                          + 4 * W1_COLS + N * OUT_W)

    out = pl.pallas_call(
        heads_kernel,
        out_shape=jax.ShapeDtypeStruct((N, OUT_W), jnp.float32),
        grid_spec=pltpu.PrefetchScalarGridSpec(
            num_scalar_prefetch=0,
            grid=(1,),                               # single step: no per-step overhead
            in_specs=[
                pl.BlockSpec((N, D), lambda i: (0, 0)),
                pl.BlockSpec((D, W1_COLS), lambda i: (0, 0)),
                pl.BlockSpec((4, HP, HP), lambda i: (0, 0, 0)),
                pl.BlockSpec((4, W1_COLS), lambda i: (0, 0)),
            ],
            out_specs=pl.BlockSpec((N, OUT_W), lambda i: (0, 0)),
        ),
        compiler_params=pltpu.CompilerParams(
            dimension_semantics=("arbitrary",)),     # tiny kernel: no TC split
        cost_estimate=pl.CostEstimate(
            flops=flops,
            transcendentals=transcendentals,
            bytes_accessed=bytes_accessed),
    )(hs_flat, w1, wdeep, bias)

    logits = out[:, COL_LOGITS:COL_LOGITS + NUM_LOGITS]
    boxes = out[:, COL_BOXES:COL_BOXES + 4]
    quad = out[:, COL_QUAD:COL_QUAD + 3]
    dirs = out[:, COL_DIRS:COL_DIRS + NUM_DIRS]
    return logits, boxes, quad, dirs


# --- plain-JAX reference for the heads (correctness check) --------------------
def ref_heads(hs_flat, params):
    (wc, bc, wb, bb, wq0, bq0, wq1, bq1,
     wd0, bd0, wd1, bd1, wd2, bd2, wd3, bd3) = params
    sig = jax.nn.sigmoid
    logits = hs_flat @ wc + bc
    boxes = sig(hs_flat @ wb + bb)
    q = sig(hs_flat @ wq0 + bq0)
    quad = sig(q @ wq1 + bq1)
    d = sig(hs_flat @ wd0 + bd0)
    d = sig(d @ wd1 + bd1)
    d = sig(d @ wd2 + bd2)
    dirs = d @ wd3 + bd3
    return logits, boxes, quad, dirs


# --- stand-in for the injected backbone / transformer / pos_embed -------------
def make_hs(key, inputs):
    # TODO(synk): backbone, transformer and build_position_encoding('sine', ...)
    # are externally-injected modules not defined in the reference source; use a
    # deterministic plain-JAX stand-in (1x1-conv backbone + sine pos encoding +
    # single cross-attention with learned queries) to produce hs: (B, Q, D).
    kp, kq, kk, kv = jax.random.split(key, 4)
    proj = jax.random.normal(kp, (C, D), jnp.float32) * 0.1
    feats = jnp.einsum('bchw,cd->bhwd', inputs, proj).reshape(B, H * W, D)

    pos_idx = jnp.arange(H * W, dtype=jnp.float32)[:, None]
    div = jnp.exp(jnp.arange(0, D, 2, dtype=jnp.float32) * (-jnp.log(10000.0) / D))
    pos = jnp.zeros((H * W, D), jnp.float32)
    pos = pos.at[:, 0::2].set(jnp.sin(pos_idx * div))
    pos = pos.at[:, 1::2].set(jnp.cos(pos_idx * div))
    mem = feats + pos[None]

    query_embed = jax.random.normal(kq, (NUM_QUERIES, D), jnp.float32)  # nn.Embedding.weight
    wk = jax.random.normal(kk, (D, D), jnp.float32) * 0.1
    wv = jax.random.normal(kv, (D, D), jnp.float32) * 0.1
    attn = jax.nn.softmax(
        jnp.einsum('qd,bnd->bqn', query_embed, mem @ wk) / jnp.sqrt(float(D)), axis=-1)
    hs = jnp.einsum('bqn,bnd->bqd', attn, mem @ wv) + query_embed[None]
    return hs


def detection_forward(inputs, key):
    k_hs, k_heads = jax.random.split(key)
    hs = make_hs(k_hs, inputs)                      # (B, Q, D)
    params = init_head_params(k_heads)
    packed = pack_head_params(params)

    hs_flat = hs.reshape(N, D).astype(jnp.float32)
    logits, boxes, quad, dirs = detection_heads(hs_flat, packed)

    out = {
        'pred_logits':     logits.reshape(B, NUM_QUERIES, NUM_LOGITS),
        'pred_boxes':      boxes.reshape(B, NUM_QUERIES, 4),
        'pred_quadrant':   quad.reshape(B, NUM_QUERIES, 3),
        'pred_directions': dirs.reshape(B, NUM_QUERIES, NUM_DIRS),
    }
    return out, hs_flat, params


if __name__ == "__main__":
    key = jax.random.PRNGKey(0)
    k_in, k_model = jax.random.split(key)
    inputs = jax.random.normal(k_in, (B, C, H, W), jnp.float32)   # NCHW

    out, hs_flat, params = detection_forward(inputs, k_model)
    jax.block_until_ready(out)

    # correctness check against a plain-JAX reference of the heads
    ref_logits, ref_boxes, ref_quad, ref_dirs = ref_heads(hs_flat, params)
    np.testing.assert_allclose(out['pred_logits'].reshape(N, -1), ref_logits, rtol=1e-5, atol=1e-5)
    np.testing.assert_allclose(out['pred_boxes'].reshape(N, -1), ref_boxes, rtol=1e-5, atol=1e-5)
    np.testing.assert_allclose(out['pred_quadrant'].reshape(N, -1), ref_quad, rtol=1e-5, atol=1e-5)
    np.testing.assert_allclose(out['pred_directions'].reshape(N, -1), ref_dirs, rtol=1e-5, atol=1e-5)

    print("KERNEL_OK")
</pallas_src>

<mosaic_0001>
module attributes {stable_mosaic.version = 11 : i64} {
  func.func @heads_kernel(%arg0: i32, %arg1: memref<16x32xf32, #tpu.memory_space<vmem>>, %arg2: memref<32x384xf32, #tpu.memory_space<vmem>>, %arg3: memref<4x128x128xf32, #tpu.memory_space<vmem>>, %arg4: memref<4x384xf32, #tpu.memory_space<vmem>>, %arg5: memref<16x128xf32, #tpu.memory_space<vmem>>) attributes {dimension_semantics = [#tpu.dimension_semantics<arbitrary>], iteration_bounds = array<i64: 1>, scalar_prefetch = 0 : i64, scratch_operands = 0 : i64, tpu.core_type = #tpu.core_type<tc>, window_params = [{pipeline_mode = #tpu.pipeline_mode<synchronous>, transform_indices = @transform_0, window_bounds = array<i64: 16, 32>}, {pipeline_mode = #tpu.pipeline_mode<synchronous>, transform_indices = @transform_1, window_bounds = array<i64: 32, 384>}, {pipeline_mode = #tpu.pipeline_mode<synchronous>, transform_indices = @transform_2, window_bounds = array<i64: 4, 128, 128>}, {pipeline_mode = #tpu.pipeline_mode<synchronous>, transform_indices = @transform_3, window_bounds = array<i64: 4, 384>}, {pipeline_mode = #tpu.pipeline_mode<synchronous>, transform_indices = @transform_4, window_bounds = array<i64: 16, 128>}]} {
    %c0 = arith.constant 0 : index
    %c0_0 = arith.constant 0 : index
    %0 = vector.load %arg1[%c0, %c0_0] : memref<16x32xf32, #tpu.memory_space<vmem>>, vector<16x32xf32>
    %c0_1 = arith.constant 0 : index
    %c0_2 = arith.constant 0 : index
    %1 = vector.load %arg2[%c0_1, %c0_2] : memref<32x384xf32, #tpu.memory_space<vmem>>, vector<32x384xf32>
    %cst = arith.constant dense<0.000000e+00> : vector<16x384xf32>
    %2 = tpu.matmul %0, %1, %cst {dimension_numbers = #tpu.dot_dimension_numbers<[1], [0], [0], [1], [0, 0, 1, 1], [], []>} : vector<16x32xf32>, vector<32x384xf32>, vector<16x384xf32> -> vector<16x384xf32>
    %c0_3 = arith.constant 0 : index
    %c0_4 = arith.constant 0 : index
    %3 = vector.load %arg4[%c0_3, %c0_4] : memref<4x384xf32, #tpu.memory_space<vmem>>, vector<1x384xf32>
    %4 = vector.broadcast %3 : vector<1x384xf32> to vector<16x384xf32>
    %5 = arith.addf %2, %4 : vector<16x384xf32>
    %6 = vector.extract_strided_slice %5 {offsets = [0, 0], sizes = [16, 128], strides = [1, 1]} : vector<16x384xf32> to vector<16x128xf32>
    %7 = vector.extract_strided_slice %5 {offsets = [0, 128], sizes = [16, 128], strides = [1, 1]} : vector<16x384xf32> to vector<16x128xf32>
    %8 = arith.negf %7 : vector<16x128xf32>
    %9 = math.exp %8 : vector<16x128xf32>
    %cst_5 = arith.constant 1.000000e+00 : f32
    %10 = vector.broadcast %cst_5 : f32 to vector<16x128xf32>
    %11 = arith.addf %10, %9 : vector<16x128xf32>
    %12 = arith.divf %10, %11 : vector<16x128xf32>
    %13 = vector.extract_strided_slice %5 {offsets = [0, 256], sizes = [16, 128], strides = [1, 1]} : vector<16x384xf32> to vector<16x128xf32>
    %14 = arith.negf %13 : vector<16x128xf32>
    %15 = math.exp %14 : vector<16x128xf32>
    %cst_6 = arith.constant 1.000000e+00 : f32
    %16 = vector.broadcast %cst_6 : f32 to vector<16x128xf32>
    %17 = arith.addf %16, %15 : vector<16x128xf32>
    %18 = arith.divf %16, %17 : vector<16x128xf32>
    %c0_7 = arith.constant 0 : index
    %c0_8 = arith.constant 0 : index
    %c0_9 = arith.constant 0 : index
    %19 = vector.load %arg3[%c0_7, %c0_8, %c0_9] : memref<4x128x128xf32, #tpu.memory_space<vmem>>, vector<1x128x128xf32>
    %20 = vector.shape_cast %19 : vector<1x128x128xf32> to vector<128x128xf32>
    %cst_10 = arith.constant dense<0.000000e+00> : vector<16x128xf32>
    %21 = tpu.matmul %18, %20, %cst_10 {dimension_numbers = #tpu.dot_dimension_numbers<[1], [0], [0], [1], [0, 0, 1, 1], [], []>} : vector<16x128xf32>, vector<128x128xf32>, vector<16x128xf32> -> vector<16x128xf32>
    %c1 = arith.constant 1 : index
    %c0_11 = arith.constant 0 : index
    %22 = vector.load %arg4[%c1, %c0_11] : memref<4x384xf32, #tpu.memory_space<vmem>>, vector<1x128xf32>
    %23 = vector.broadcast %22 : vector<1x128xf32> to vector<16x128xf32>
    %24 = arith.addf %21, %23 : vector<16x128xf32>
    %25 = arith.negf %24 : vector<16x128xf32>
    %26 = math.exp %25 : vector<16x128xf32>
    %cst_12 = arith.constant 1.000000e+00 : f32
    %27 = vector.broadcast %cst_12 : f32 to vector<16x128xf32>
    %28 = arith.addf %27, %26 : vector<16x128xf32>
    %29 = arith.divf %27, %28 : vector<16x128xf32>
    %c1_13 = arith.constant 1 : index
    %c0_14 = arith.constant 0 : index
    %c0_15 = arith.constant 0 : index
    %30 = vector.load %arg3[%c1_13, %c0_14, %c0_15] : memref<4x128x128xf32, #tpu.memory_space<vmem>>, vector<1x128x128xf32>
    %31 = vector.shape_cast %30 : vector<1x128x128xf32> to vector<128x128xf32>
    %cst_16 = arith.constant dense<0.000000e+00> : vector<16x128xf32>
    %32 = tpu.matmul %29, %31, %cst_16 {dimension_numbers = #tpu.dot_dimension_numbers<[1], [0], [0], [1], [0, 0, 1, 1], [], []>} : vector<16x128xf32>, vector<128x128xf32>, vector<16x128xf32> -> vector<16x128xf32>
    %c2 = arith.constant 2 : index
    %c0_17 = arith.constant 0 : index
    %33 = vector.load %arg4[%c2, %c0_17] : memref<4x384xf32, #tpu.memory_space<vmem>>, vector<1x128xf32>
    %34 = vector.broadcast %33 : vector<1x128xf32> to vector<16x128xf32>
    %35 = arith.addf %32, %34 : vector<16x128xf32>
    %36 = arith.negf %35 : vector<16x128xf32>
    %37 = math.exp %36 : vector<16x128xf32>
    %cst_18 = arith.constant 1.000000e+00 : f32
    %38 = vector.broadcast %cst_18 : f32 to vector<16x128xf32>
    %39 = arith.addf %38, %37 : vector<16x128xf32>
    %40 = arith.divf %38, %39 : vector<16x128xf32>
    %c2_19 = arith.constant 2 : index
    %c0_20 = arith.constant 0 : index
    %c0_21 = arith.constant 0 : index
    %41 = vector.load %arg3[%c2_19, %c0_20, %c0_21] : memref<4x128x128xf32, #tpu.memory_space<vmem>>, vector<1x128x128xf32>
    %42 = vector.shape_cast %41 : vector<1x128x128xf32> to vector<128x128xf32>
    %cst_22 = arith.constant dense<0.000000e+00> : vector<16x128xf32>
    %43 = tpu.matmul %12, %42, %cst_22 {dimension_numbers = #tpu.dot_dimension_numbers<[1], [0], [0], [1], [0, 0, 1, 1], [], []>} : vector<16x128xf32>, vector<128x128xf32>, vector<16x128xf32> -> vector<16x128xf32>
    %44 = arith.addf %6, %43 : vector<16x128xf32>
    %c3 = arith.constant 3 : index
    %c0_23 = arith.constant 0 : index
    %c0_24 = arith.constant 0 : index
    %45 = vector.load %arg3[%c3, %c0_23, %c0_24] : memref<4x128x128xf32, #tpu.memory_space<vmem>>, vector<1x128x128xf32>
    %46 = vector.shape_cast %45 : vector<1x128x128xf32> to vector<128x128xf32>
    %cst_25 = arith.constant dense<0.000000e+00> : vector<16x128xf32>
    %47 = tpu.matmul %40, %46, %cst_25 {dimension_numbers = #tpu.dot_dimension_numbers<[1], [0], [0], [1], [0, 0, 1, 1], [], []>} : vector<16x128xf32>, vector<128x128xf32>, vector<16x128xf32> -> vector<16x128xf32>
    %48 = arith.addf %44, %47 : vector<16x128xf32>
    %c3_26 = arith.constant 3 : index
    %c0_27 = arith.constant 0 : index
    %49 = vector.load %arg4[%c3_26, %c0_27] : memref<4x384xf32, #tpu.memory_space<vmem>>, vector<1x128xf32>
    %50 = vector.broadcast %49 : vector<1x128xf32> to vector<16x128xf32>
    %51 = arith.addf %48, %50 : vector<16x128xf32>
    %52 = tpu.iota {dimensions = array<i32: 1>} : vector<16x128xi32>
    %c5_i32 = arith.constant 5 : i32
    %53 = vector.broadcast %c5_i32 : i32 to vector<16x128xi32>
    %54 = arith.cmpi sge, %52, %53 : vector<16x128xi32>
    %c12_i32 = arith.constant 12 : i32
    %55 = vector.broadcast %c12_i32 : i32 to vector<16x128xi32>
    %56 = arith.cmpi slt, %52, %55 : vector<16x128xi32>
    %57 = arith.andi %54, %56 : vector<16x128xi1>
    %58 = arith.negf %51 : vector<16x128xf32>
    %59 = math.exp %58 : vector<16x128xf32>
    %cst_28 = arith.constant 1.000000e+00 : f32
    %60 = vector.broadcast %cst_28 : f32 to vector<16x128xf32>
    %61 = arith.addf %60, %59 : vector<16x128xf32>
    %62 = arith.divf %60, %61 : vector<16x128xf32>
    %63 = arith.select %57, %62, %51 : vector<16x128xi1>, vector<16x128xf32>
    %c0_29 = arith.constant 0 : index
    %c0_30 = arith.constant 0 : index
    %64 = vector.load %arg5[%c0_29, %c0_30] : memref<16x128xf32, #tpu.memory_space<vmem>>, vector<16x128xf32>
    tpu.vector_store %arg5[%c0_29, %c0_30], %63 {strides = array<i32>} : memref<16x128xf32, #tpu.memory_space<vmem>>, vector<16x128xf32>,
    return
  }
  func.func @transform_0(%arg0: i32) -> (i32, i32) {
    %c0_i32 = arith.constant 0 : i32
    %c0_i32_0 = arith.constant 0 : i32
    %c0_i32_1 = arith.constant 0 : i32
    return %c0_i32, %c0_i32_0 : i32, i32
  }
  func.func @transform_1(%arg0: i32) -> (i32, i32) {
    %c0_i32 = arith.constant 0 : i32
    %c0_i32_0 = arith.constant 0 : i32
    %c0_i32_1 = arith.constant 0 : i32
    return %c0_i32, %c0_i32_0 : i32, i32
  }
  func.func @transform_2(%arg0: i32) -> (i32, i32, i32) {
    %c0_i32 = arith.constant 0 : i32
    %c0_i32_0 = arith.constant 0 : i32
    %c0_i32_1 = arith.constant 0 : i32
    %c0_i32_2 = arith.constant 0 : i32
    return %c0_i32, %c0_i32_0, %c0_i32_1 : i32, i32, i32
  }
  func.func @transform_3(%arg0: i32) -> (i32, i32) {
    %c0_i32 = arith.constant 0 : i32
    %c0_i32_0 = arith.constant 0 : i32
    %c0_i32_1 = arith.constant 0 : i32
    return %c0_i32, %c0_i32_0 : i32, i32
  }
  func.func @transform_4(%arg0: i32) -> (i32, i32) {
    %c0_i32 = arith.constant 0 : i32
    %c0_i32_0 = arith.constant 0 : i32
    %c0_i32_1 = arith.constant 0 : i32
    return %c0_i32, %c0_i32_0 : i32, i32
  }
}

</mosaic_0001>

<llo_original>
// kernel: tpu_custom_call.1
$region0: #{tpu_custom_call.1}
  #allocation0 [shape = 'u32[]', space=smem, size = 0x4, offset = 0x4, fixed_abs, tag = 'smem constant byte address 0x4 - core index']
  #allocation1 [shape = 'u32[144,128]{1,0:T(1,128)}', space=vmem, size = 0x12000, scoped, tag = 'internal scratch']
  %s0 = inlined_call_operand.hbm [shape: f32[16,32], index: 0, kind: input, shape index: {}]
  %s1 = inlined_call_operand.hbm [shape: f32[32,384], index: 1, kind: input, shape index: {}]
  %s2 = inlined_call_operand.hbm [shape: f32[4,128,128], index: 2, kind: input, shape index: {}]
  %s3 = inlined_call_operand.hbm [shape: f32[4,384], index: 3, kind: input, shape index: {}]
  %s4 = inlined_call_operand.hbm [shape: f32[16,128], index: 4, kind: output, shape index: {}]
  %s5 = sld [smem:[#allocation0]]
  $region42: #{tpu_custom_call.1} parent=0
    _
  %s7 = ssub.s32 1, %s5
  %s8 = scalar_select 0, %s7, %s5
  $region1: #{tpu_custom_call.1} parent=0
    #allocation2 [shape = 'u8[8192]{0}', space=vmem, size = 0x2000, scoped, tag = 'input window, operand 0, single buffered']
    #allocation3 [shape = 's32[1]{0}', space=sflag, size = 0x4, scoped, tag = 'scoped memory for tpu_custom_call.1']
    #allocation4 [shape = 's32[1]{0}', space=sflag, size = 0x4, scoped, tag = 'scoped memory for tpu_custom_call.1']
    #allocation5 [shape = 'u8[49152]{0}', space=vmem, size = 0xc000, scoped, tag = 'input window, operand 1, single buffered']
    #allocation6 [shape = 's32[1]{0}', space=sflag, size = 0x4, scoped, tag = 'scoped memory for tpu_custom_call.1']
    #allocation7 [shape = 'u8[262144]{0}', space=vmem, size = 0x40000, scoped, tag = 'input window, operand 2, single buffered']
    #allocation8 [shape = 'u8[6144]{0}', space=vmem, size = 0x1800, scoped, tag = 'input window, operand 3, single buffered']
    #allocation9 [shape = 's32[1]{0}', space=sflag, size = 0x4, scoped, tag = 'scoped memory for tpu_custom_call.1']
    #allocation10 [shape = 'u8[8192]{0}', space=vmem, size = 0x2000, scoped, tag = 'output window, operand 0, single buffered']
    %9 = vsyncpa [#allocation3], 0
    %10 = vsyncpa [#allocation6], 0
    %11 = vsyncpa [#allocation9], 0
    %12 = vsyncpa [#allocation4], 0
    // Predicated region
    $region2: #{tpu_custom_call.1} parent=1 // pred_check
      _
    $region3: #{tpu_custom_call.1} parent=1 // pred_check_branch
      %14 = sbr.rel (0) target = $region5
    $region4: #{tpu_custom_call.1} parent=1 // pred_region
      %s16 = ssub.s32 256, 256
      %17 = vsyncadd [#allocation3], %s16
      %s18 = sshll.u32 [#allocation2], 4
      %s19 = int_to_ptr.vmem [resolvable:$true] %s18
      %24 = dma.hbm_to_vmem [thread:$0]  %s0, 256, %s19, [#allocation3], 128, 128, 8
    $region5: #{tpu_custom_call.1} parent=1 // pred_fallthru
      _
    // Predicated region
    $region6: #{tpu_custom_call.1} parent=1 // pred_check
      _
    $region7: #{tpu_custom_call.1} parent=1 // pred_check_branch
      %26 = sbr.rel (0) target = $region9
    $region8: #{tpu_custom_call.1} parent=1 // pred_region
      %s28 = ssub.s32 1536, 1536
      %29 = vsyncadd [#allocation6], %s28
      %s30 = sshll.u32 [#allocation5], 4
      %s31 = int_to_ptr.vmem [resolvable:$true] %s30
      %36 = dma.hbm_to_vmem [thread:$0]  %s1, 1536, %s31, [#allocation6], 384, 384, 24
    $region9: #{tpu_custom_call.1} parent=1 // pred_fallthru
      _
    // Predicated region
    $region10: #{tpu_custom_call.1} parent=1 // pred_check
      _
    $region11: #{tpu_custom_call.1} parent=1 // pred_check_branch
      %38 = sbr.rel (0) target = $region13
    $region12: #{tpu_custom_call.1} parent=1 // pred_region
      %s40 = ssub.s32 8192, 8192
      %41 = vsyncadd [#allocation6], %s40
      %s42 = sshll.u32 [#allocation7], 4
      %s43 = int_to_ptr.vmem [resolvable:$true] %s42
      %48 = dma.hbm_to_vmem [thread:$0]  %s2, 8192, %s43, [#allocation6], 128, 128, 8
    $region13: #{tpu_custom_call.1} parent=1 // pred_fallthru
      _
    // Predicated region
    $region14: #{tpu_custom_call.1} parent=1 // pred_check
      _
    $region15: #{tpu_custom_call.1} parent=1 // pred_check_branch
      %50 = sbr.rel (0) target = $region17
    $region16: #{tpu_custom_call.1} parent=1 // pred_region
      %s52 = ssub.s32 192, 192
      %53 = vsyncadd [#allocation9], %s52
      %s55 = sshll.u32 [#allocation8], 4
      %s56 = int_to_ptr.vmem [resolvable:$true] %s55
      %58 = dma.hbm_to_vmem [thread:$0]  %s3, 192, %s56, [#allocation9]
    $region17: #{tpu_custom_call.1} parent=1 // pred_fallthru
      _
    // Predicated region
    $region18: #{tpu_custom_call.1} parent=1 // pred_check
      _
    $region19: #{tpu_custom_call.1} parent=1 // pred_check_branch
      %60 = sbr.rel (0) target = $region21
    $region20: #{tpu_custom_call.1} parent=1 // pred_region
      %61 = dma.done [#allocation3], 256
    $region21: #{tpu_custom_call.1} parent=1 // pred_fallthru
      _
    // Predicated region
    $region22: #{tpu_custom_call.1} parent=1 // pred_check
      _
    $region23: #{tpu_custom_call.1} parent=1 // pred_check_branch
      %63 = sbr.rel (0) target = $region25
    $region24: #{tpu_custom_call.1} parent=1 // pred_region
      %64 = dma.done [#allocation6], 1536
    $region25: #{tpu_custom_call.1} parent=1 // pred_fallthru
      _
    // Predicated region
    $region26: #{tpu_custom_call.1} parent=1 // pred_check
      _
    $region27: #{tpu_custom_call.1} parent=1 // pred_check_branch
      %66 = sbr.rel (0) target = $region29
    $region28: #{tpu_custom_call.1} parent=1 // pred_region
      %67 = dma.done [#allocation6], 8192
    $region29: #{tpu_custom_call.1} parent=1 // pred_fallthru
      _
    // Predicated region
    $region30: #{tpu_custom_call.1} parent=1 // pred_check
      _
    $region31: #{tpu_custom_call.1} parent=1 // pred_check_branch
      %69 = sbr.rel (0) target = $region33
    $region32: #{tpu_custom_call.1} parent=1 // pred_region
      %70 = dma.done [#allocation9], 192
    $region33: #{tpu_custom_call.1} parent=1 // pred_fallthru
      _
    %v71 = vld [vmem:[#allocation2] sm:$0xff]
    %v72 = vld [vmem:[#allocation2 + $0x8] sm:$0xff]
    %v73 = vld [vmem:[#allocation5] sm:$0xff]
    %v74 = vld [vmem:[#allocation5 + $0x8] sm:$0xff]
    %v75 = vld [vmem:[#allocation5 + $0x10] sm:$0xff]
    %v76 = vld [vmem:[#allocation5 + $0x18] sm:$0xff]
    %v77 = vld [vmem:[#allocation5 + $0x20] sm:$0xff]
    %v78 = vld [vmem:[#allocation5 + $0x28] sm:$0xff]
    %v79 = vld [vmem:[#allocation5 + $0x30] sm:$0xff]
    %v80 = vld [vmem:[#allocation5 + $0x38] sm:$0xff]
    %v81 = vld [vmem:[#allocation5 + $0x40] sm:$0xff]
    %v82 = vld [vmem:[#allocation5 + $0x48] sm:$0xff]
    %v83 = vld [vmem:[#allocation5 + $0x50] sm:$0xff]
    %v84 = vld [vmem:[#allocation5 + $0x58] sm:$0xff]
    %v85 = vld [vmem:[#allocation8] ss:$4 sm:$0x7]
    %v87 = vlaneseq
    %v88 = vshrl.u32 %v87, 7
    %v89 = vsub.s32 0, %v88
    %v90 = vrot.slane %v85, %v89
    %v91 = vlaneseq
    %v92 = vshrl.u32 %v91, 7
    %v93 = vsub.s32 1, %v92
    %v94 = vrot.slane %v85, %v93
    %v95 = vlaneseq
    %v96 = vshrl.u32 %v95, 7
    %v97 = vsub.s32 2, %v96
    %v98 = vrot.slane %v85, %v97
    %vm102 = vcmask 261120
    %v104 = vsel %vm102, %v71, 0
    %v107 = vsel %vm102, %v72, 0
    %109 = vmatprep.subr.mxu0 0.0
    %110 = vmatpush1.msra.mxu0 0.0
    %111 = vmatprep.subr.mxu0 0.0
    %112 = vmatpush1.msra.mxu0 0.0
    %113 = vmatprep.subr.mxu0 0.0
    %114 = vmatpush1.msra.mxu0 0.0
    %115 = vmatprep.subr.mxu0 0.0
    %116 = vmatpush1.msra.mxu0 0.0
    %117 = vmatprep.subr.mxu0 0.0
    %118 = vmatpush1.msra.mxu0 0.0
    %119 = vmatprep.subr.mxu0 0.0
    %120 = vmatpush1.msra.mxu0 0.0
    %121 = vmatprep.subr.mxu0 0.0
    %122 = vmatpush1.msra.mxu0 0.0
    %123 = vmatprep.subr.mxu0 0.0
    %124 = vmatpush1.msra.mxu0 0.0
    %125 = vmatprep.subr.mxu0 0.0
    %126 = vmatpush1.msra.mxu0 0.0
    %127 = vmatprep.subr.mxu0 0.0
    %128 = vmatpush1.msra.mxu0 0.0
    %129 = vmatprep.subr.mxu0 0.0
    %130 = vmatpush1.msra.mxu0 0.0
    %131 = vmatprep.subr.mxu0 0.0
    %132 = vmatpush1.msra.mxu0 0.0
    %133 = vmatprep.subr.mxu0 %v83
    %134 = vmatpush1.msra.mxu0 %v82
    %135 = vmatprep.subr.mxu0 %v80
    %136 = vmatpush1.msra.mxu0 %v79
    %137 = vmatprep.subr.mxu0 %v77
    %138 = vmatpush1.msra.mxu0 %v76
    %139 = vmatprep.subr.mxu0 %v74
    %140 = vmatpush1.msra.mxu0 %v73
    %141 = vmatprep.subr.mxu0 0.0
    %142 = vmatpush2.msra.mxu0 0.0
    %143 = vmatprep.subr.mxu0 0.0
    %144 = vmatpush2.msra.mxu0 0.0
    %145 = vmatprep.subr.mxu0 0.0
    %146 = vmatpush2.msra.mxu0 0.0
    %147 = vmatprep.subr.mxu0 0.0
    %148 = vmatpush2.msra.mxu0 0.0
    %149 = vmatprep.subr.mxu0 0.0
    %150 = vmatpush2.msra.mxu0 0.0
    %151 = vmatprep.subr.mxu0 0.0
    %152 = vmatpush2.msra.mxu0 0.0
    %153 = vmatprep.subr.mxu0 0.0
    %154 = vmatpush2.msra.mxu0 0.0
    %155 = vmatprep.subr.mxu0 0.0
    %156 = vmatpush2.msra.mxu0 0.0
    %157 = vmatprep.subr.mxu0 0.0
    %158 = vmatpush2.msra.mxu0 0.0
    %159 = vmatprep.subr.mxu0 0.0
    %160 = vmatpush2.msra.mxu0 0.0
    %161 = vmatprep.subr.mxu0 0.0
    %162 = vmatpush2.msra.mxu0 0.0
    %163 = vmatprep.subr.mxu0 0.0
    %164 = vmatpush2.msra.mxu0 0.0
    %165 = vmatprep.subr.mxu0 0.0
    %166 = vmatpush2.msra.mxu0 0.0
    %167 = vmatprep.subr.mxu0 0.0
    %168 = vmatpush2.msra.mxu0 0.0
    %169 = vmatprep.subr.mxu0 0.0
    %170 = vmatpush2.msra.mxu0 0.0
    %171 = vmatprep.subr.mxu0 0.0
    %172 = vmatpush2.msra.mxu0 0.0
    %173 = vmatprep.mubr.f32.mxu0 0.0
    %174 = vmatmul.mubr.f32.gmra.mxu0 %v104
    %v175 = vpop.f32.mrf.mxu0
    %v176 = vadd.f32 %v90, %v175
    %v177 = vpop.f32.mrf.mxu0
    %v178 = vadd.f32 %v94, %v177
    %179 = vmatprep.mubr.f32.mxu0 0.0
    %180 = vmatmul.mubr.f32.gmra.mxu0 %v107
    %v181 = vpop.f32.mrf.mxu0
    %v182 = vadd.f32 %v90, %v181
    %v183 = vpop.f32.mrf.mxu0
    %v184 = vadd.f32 %v94, %v183
    %185 = vdwg.mxu0
    %186 = vmatprep.subr.mxu0 0.0
    %187 = vmatpush1.msra.mxu0 0.0
    %188 = vmatprep.subr.mxu0 0.0
    %189 = vmatpush1.msra.mxu0 0.0
    %190 = vmatprep.subr.mxu0 0.0
    %191 = vmatpush1.msra.mxu0 0.0
    %192 = vmatprep.subr.mxu0 0.0
    %193 = vmatpush1.msra.mxu0 0.0
    %194 = vmatprep.subr.mxu0 0.0
    %195 = vmatpush1.msra.mxu0 0.0
    %196 = vmatprep.subr.mxu0 0.0
    %197 = vmatpush1.msra.mxu0 0.0
    %198 = vmatprep.subr.mxu0 0.0
    %199 = vmatpush1.msra.mxu0 0.0
    %200 = vmatprep.subr.mxu0 0.0
    %201 = vmatpush1.msra.mxu0 0.0
    %202 = vmatprep.subr.mxu0 0.0
    %203 = vmatpush1.msra.mxu0 0.0
    %204 = vmatprep.subr.mxu0 0.0
    %205 = vmatpush1.msra.mxu0 0.0
    %206 = vmatprep.subr.mxu0 0.0
    %207 = vmatpush1.msra.mxu0 0.0
    %208 = vmatprep.subr.mxu0 0.0
    %209 = vmatpush1.msra.mxu0 0.0
    %210 = vmatprep.subr.mxu0 0.0
    %211 = vmatpush1.msra.mxu0 %v84
    %212 = vmatprep.subr.mxu0 0.0
    %213 = vmatpush1.msra.mxu0 %v81
    %214 = vmatprep.subr.mxu0 0.0
    %215 = vmatpush1.msra.mxu0 %v78
    %216 = vmatprep.subr.mxu0 0.0
    %217 = vmatpush1.msra.mxu0 %v75
    %218 = vmatprep.subr.mxu0 0.0
    %219 = vmatpush2.msra.mxu0 0.0
    %220 = vmatprep.subr.mxu0 0.0
    %221 = vmatpush2.msra.mxu0 0.0
    %222 = vmatprep.subr.mxu0 0.0
    %223 = vmatpush2.msra.mxu0 0.0
    %224 = vmatprep.subr.mxu0 0.0
    %225 = vmatpush2.msra.mxu0 0.0
    %226 = vmatprep.subr.mxu0 0.0
    %227 = vmatpush2.msra.mxu0 0.0
    %228 = vmatprep.subr.mxu0 0.0
    %229 = vmatpush2.msra.mxu0 0.0
    %230 = vmatprep.subr.mxu0 0.0
    %231 = vmatpush2.msra.mxu0 0.0
    %232 = vmatprep.subr.mxu0 0.0
    %233 = vmatpush2.msra.mxu0 0.0
    %234 = vmatprep.subr.mxu0 0.0
    %235 = vmatpush2.msra.mxu0 0.0
    %236 = vmatprep.subr.mxu0 0.0
    %237 = vmatpush2.msra.mxu0 0.0
    %238 = vmatprep.subr.mxu0 0.0
    %239 = vmatpush2.msra.mxu0 0.0
    %240 = vmatprep.subr.mxu0 0.0
    %241 = vmatpush2.msra.mxu0 0.0
    %242 = vmatprep.subr.mxu0 0.0
    %243 = vmatpush2.msra.mxu0 0.0
    %244 = vmatprep.subr.mxu0 0.0
    %245 = vmatpush2.msra.mxu0 0.0
    %246 = vmatprep.subr.mxu0 0.0
    %247 = vmatpush2.msra.mxu0 0.0
    %248 = vmatprep.subr.mxu0 0.0
    %249 = vmatpush2.msra.mxu0 0.0
    %250 = vmatprep.mubr.f32.mxu0 0.0
    %251 = vmatmul.mubr.f32.gmra.mxu0 %v104
    %v252 = vpop.f32.mrf.mxu0
    %v253 = vadd.f32 %v98, %v252
    %v254 = vpop.f32.mrf.mxu0
    %255 = vmatprep.mubr.f32.mxu0 0.0
    %256 = vmatmul.mubr.f32.gmra.mxu0 %v107
    %v257 = vpop.f32.mrf.mxu0
    %v258 = vadd.f32 %v98, %v257
    %v259 = vpop.f32.mrf.mxu0
    %260 = vdwg.mxu0
    %v261 = vxor.u32 %v178, 2147483648
    %v262 = vxor.u32 %v184, 2147483648
    %v263 = vmul.f32 %v261, 1.442695
    %v264 = vpow.pop %v263
    %v265 = vmul.f32 %v262, 1.442695
    %v266 = vpow.pop %v265
    %v267 = vadd.f32 %v264, 1.0
    %v268 = vadd.f32 %v266, 1.0
    %v269 = vrcp.pop %v267
    %v270 = vmul.f32 1.0, %v269
    %v271 = vrcp.pop %v268
    %v272 = vmul.f32 1.0, %v271
    %v273 = vxor.u32 %v253, 2147483648
    %v274 = vxor.u32 %v258, 2147483648
    %v275 = vmul.f32 %v273, 1.442695
    %v276 = vpow.pop %v275
    %v277 = vmul.f32 %v274, 1.442695
    %v278 = vpow.pop %v277
    %v279 = vadd.f32 %v276, 1.0
    %v280 = vadd.f32 %v278, 1.0
    %v281 = vrcp.pop %v279
    %v282 = vmul.f32 1.0, %v281
    %v283 = vrcp.pop %v280
    %v284 = vmul.f32 1.0, %v283
    %v285 = vld [vmem:[#allocation7] sm:$0xff]
    %v286 = vld [vmem:[#allocation7 + $0x8] sm:$0xff]
    %v287 = vld [vmem:[#allocation7 + $0x10] sm:$0xff]
    %v288 = vld [vmem:[#allocation7 + $0x18] sm:$0xff]
    %v289 = vld [vmem:[#allocation7 + $0x20] sm:$0xff]
    %v290 = vld [vmem:[#allocation7 + $0x28] sm:$0xff]
    %v291 = vld [vmem:[#allocation7 + $0x30] sm:$0xff]
    %v292 = vld [vmem:[#allocation7 + $0x38] sm:$0xff]
    %v293 = vld [vmem:[#allocation7 + $0x40] sm:$0xff]
    %v294 = vld [vmem:[#allocation7 + $0x48] sm:$0xff]
    %v295 = vld [vmem:[#allocation7 + $0x50] sm:$0xff]
    %v296 = vld [vmem:[#allocation7 + $0x58] sm:$0xff]
    %v297 = vld [vmem:[#allocation7 + $0x60] sm:$0xff]
    %v298 = vld [vmem:[#allocation7 + $0x68] sm:$0xff]
    %v299 = vld [vmem:[#allocation7 + $0x70] sm:$0xff]
    %v300 = vld [vmem:[#allocation7 + $0x78] sm:$0xff]
    %v301 = vld [vmem:[#allocation8 + $0x1] sm:$0x1]
    %v302 = vlaneseq
    %v303 = vshrl.u32 %v302, 7
    %v304 = vsub.s32 0, %v303
    %v305 = vrot.slane %v301, %v304
    %306 = vmatprep.subr.mxu0 0.0
    %307 = vmatpush1.msra.mxu0 %v300
    %308 = vmatprep.subr.mxu0 0.0
    %309 = vmatpush1.msra.mxu0 %v299
    %310 = vmatprep.subr.mxu0 0.0
    %311 = vmatpush1.msra.mxu0 %v298
    %312 = vmatprep.subr.mxu0 0.0
    %313 = vmatpush1.msra.mxu0 %v297
    %314 = vmatprep.subr.mxu0 0.0
    %315 = vmatpush1.msra.mxu0 %v296
    %316 = vmatprep.subr.mxu0 0.0
    %317 = vmatpush1.msra.mxu0 %v295
    %318 = vmatprep.subr.mxu0 0.0
    %319 = vmatpush1.msra.mxu0 %v294
    %320 = vmatprep.subr.mxu0 0.0
    %321 = vmatpush1.msra.mxu0 %v293
    %322 = vmatprep.subr.mxu0 0.0
    %323 = vmatpush1.msra.mxu0 %v292
    %324 = vmatprep.subr.mxu0 0.0
    %325 = vmatpush1.msra.mxu0 %v291
    %326 = vmatprep.subr.mxu0 0.0
    %327 = vmatpush1.msra.mxu0 %v290
    %328 = vmatprep.subr.mxu0 0.0
    %329 = vmatpush1.msra.mxu0 %v289
    %330 = vmatprep.subr.mxu0 0.0
    %331 = vmatpush1.msra.mxu0 %v288
    %332 = vmatprep.subr.mxu0 0.0
    %333 = vmatpush1.msra.mxu0 %v287
    %334 = vmatprep.subr.mxu0 0.0
    %335 = vmatpush1.msra.mxu0 %v286
    %336 = vmatprep.subr.mxu0 0.0
    %337 = vmatpush1.msra.mxu0 %v285
    %338 = vmatprep.subr.mxu0 0.0
    %339 = vmatpush2.msra.mxu0 0.0
    %340 = vmatprep.subr.mxu0 0.0
    %341 = vmatpush2.msra.mxu0 0.0
    %342 = vmatprep.subr.mxu0 0.0
    %343 = vmatpush2.msra.mxu0 0.0
    %344 = vmatprep.subr.mxu0 0.0
    %345 = vmatpush2.msra.mxu0 0.0
    %346 = vmatprep.subr.mxu0 0.0
    %347 = vmatpush2.msra.mxu0 0.0
    %348 = vmatprep.subr.mxu0 0.0
    %349 = vmatpush2.msra.mxu0 0.0
    %350 = vmatprep.subr.mxu0 0.0
    %351 = vmatpush2.msra.mxu0 0.0
    %352 = vmatprep.subr.mxu0 0.0
    %353 = vmatpush2.msra.mxu0 0.0
    %354 = vmatprep.subr.mxu0 0.0
    %355 = vmatpush2.msra.mxu0 0.0
    %356 = vmatprep.subr.mxu0 0.0
    %357 = vmatpush2.msra.mxu0 0.0
    %358 = vmatprep.subr.mxu0 0.0
    %359 = vmatpush2.msra.mxu0 0.0
    %360 = vmatprep.subr.mxu0 0.0
    %361 = vmatpush2.msra.mxu0 0.0
    %362 = vmatprep.subr.mxu0 0.0
    %363 = vmatpush2.msra.mxu0 0.0
    %364 = vmatprep.subr.mxu0 0.0
    %365 = vmatpush2.msra.mxu0 0.0
    %366 = vmatprep.subr.mxu0 0.0
    %367 = vmatpush2.msra.mxu0 0.0
    %368 = vmatprep.subr.mxu0 0.0
    %369 = vmatpush2.msra.mxu0 0.0
    %370 = vmatprep.mubr.f32.mxu0 0.0
    %371 = vmatmul.mubr.f32.gmra.mxu0 %v282
    %v372 = vpop.f32.mrf.mxu0
    %v373 = vadd.f32 %v305, %v372
    %v374 = vpop.f32.mrf.mxu0
    %375 = vmatprep.mubr.f32.mxu0 0.0
    %376 = vmatmul.mubr.f32.gmra.mxu0 %v284
    %v377 = vpop.f32.mrf.mxu0
    %v378 = vadd.f32 %v305, %v377
    %v379 = vpop.f32.mrf.mxu0
    %380 = vdwg.mxu0
    %v381 = vxor.u32 %v373, 2147483648
    %v382 = vxor.u32 %v378, 2147483648
    %v383 = vmul.f32 %v381, 1.442695
    %v384 = vpow.pop %v383
    %v385 = vmul.f32 %v382, 1.442695
    %v386 = vpow.pop %v385
    %v387 = vadd.f32 %v384, 1.0
    %v388 = vadd.f32 %v386, 1.0
    %v389 = vrcp.pop %v387
    %v390 = vmul.f32 1.0, %v389
    %v391 = vrcp.pop %v388
    %v392 = vmul.f32 1.0, %v391
    %s393 = scalar_lea.vmem [#allocation7], 128
    %v394 = vld [vmem:[%s393] sm:$0xff]
    %v395 = vld [vmem:[%s393 + $0x8] sm:$0xff]
    %v396 = vld [vmem:[%s393 + $0x10] sm:$0xff]
    %v397 = vld [vmem:[%s393 + $0x18] sm:$0xff]
    %v398 = vld [vmem:[%s393 + $0x20] sm:$0xff]
    %v399 = vld [vmem:[%s393 + $0x28] sm:$0xff]
    %v400 = vld [vmem:[%s393 + $0x30] sm:$0xff]
    %v401 = vld [vmem:[%s393 + $0x38] sm:$0xff]
    %v402 = vld [vmem:[%s393 + $0x40] sm:$0xff]
    %v403 = vld [vmem:[%s393 + $0x48] sm:$0xff]
    %v404 = vld [vmem:[%s393 + $0x50] sm:$0xff]
    %v405 = vld [vmem:[%s393 + $0x58] sm:$0xff]
    %v406 = vld [vmem:[%s393 + $0x60] sm:$0xff]
    %v407 = vld [vmem:[%s393 + $0x68] sm:$0xff]
    %v408 = vld [vmem:[%s393 + $0x70] sm:$0xff]
    %v409 = vld [vmem:[%s393 + $0x78] sm:$0xff]
    %v410 = vld [vmem:[#allocation8 + $0x2] sm:$0x1]
    %v411 = vlaneseq
    %v412 = vshrl.u32 %v411, 7
    %v413 = vsub.s32 0, %v412
    %v414 = vrot.slane %v410, %v413
    %415 = vmatprep.subr.mxu0 0.0
    %416 = vmatpush1.msra.mxu0 %v409
    %417 = vmatprep.subr.mxu0 0.0
    %418 = vmatpush1.msra.mxu0 %v408
    %419 = vmatprep.subr.mxu0 0.0
    %420 = vmatpush1.msra.mxu0 %v407
    %421 = vmatprep.subr.mxu0 0.0
    %422 = vmatpush1.msra.mxu0 %v406
    %423 = vmatprep.subr.mxu0 0.0
    %424 = vmatpush1.msra.mxu0 %v405
    %425 = vmatprep.subr.mxu0 0.0
    %426 = vmatpush1.msra.mxu0 %v404
    %427 = vmatprep.subr.mxu0 0.0
    %428 = vmatpush1.msra.mxu0 %v403
    %429 = vmatprep.subr.mxu0 0.0
    %430 = vmatpush1.msra.mxu0 %v402
    %431 = vmatprep.subr.mxu0 0.0
    %432 = vmatpush1.msra.mxu0 %v401
    %433 = vmatprep.subr.mxu0 0.0
    %434 = vmatpush1.msra.mxu0 %v400
    %435 = vmatprep.subr.mxu0 0.0
    %436 = vmatpush1.msra.mxu0 %v399
    %437 = vmatprep.subr.mxu0 0.0
    %438 = vmatpush1.msra.mxu0 %v398
    %439 = vmatprep.subr.mxu0 0.0
    %440 = vmatpush1.msra.mxu0 %v397
    %441 = vmatprep.subr.mxu0 0.0
    %442 = vmatpush1.msra.mxu0 %v396
    %443 = vmatprep.subr.mxu0 0.0
    %444 = vmatpush1.msra.mxu0 %v395
    %445 = vmatprep.subr.mxu0 0.0
    %446 = vmatpush1.msra.mxu0 %v394
    %447 = vmatprep.subr.mxu0 0.0
    %448 = vmatpush2.msra.mxu0 0.0
    %449 = vmatprep.subr.mxu0 0.0
    %450 = vmatpush2.msra.mxu0 0.0
    %451 = vmatprep.subr.mxu0 0.0
    %452 = vmatpush2.msra.mxu0 0.0
    %453 = vmatprep.subr.mxu0 0.0
    %454 = vmatpush2.msra.mxu0 0.0
    %455 = vmatprep.subr.mxu0 0.0
    %456 = vmatpush2.msra.mxu0 0.0
    %457 = vmatprep.subr.mxu0 0.0
    %458 = vmatpush2.msra.mxu0 0.0
    %459 = vmatprep.subr.mxu0 0.0
    %460 = vmatpush2.msra.mxu0 0.0
    %461 = vmatprep.subr.mxu0 0.0
    %462 = vmatpush2.msra.mxu0 0.0
    %463 = vmatprep.subr.mxu0 0.0
    %464 = vmatpush2.msra.mxu0 0.0
    %465 = vmatprep.subr.mxu0 0.0
    %466 = vmatpush2.msra.mxu0 0.0
    %467 = vmatprep.subr.mxu0 0.0
    %468 = vmatpush2.msra.mxu0 0.0
    %469 = vmatprep.subr.mxu0 0.0
    %470 = vmatpush2.msra.mxu0 0.0
    %471 = vmatprep.subr.mxu0 0.0
    %472 = vmatpush2.msra.mxu0 0.0
    %473 = vmatprep.subr.mxu0 0.0
    %474 = vmatpush2.msra.mxu0 0.0
    %475 = vmatprep.subr.mxu0 0.0
    %476 = vmatpush2.msra.mxu0 0.0
    %477 = vmatprep.subr.mxu0 0.0
    %478 = vmatpush2.msra.mxu0 0.0
    %479 = vmatprep.mubr.f32.mxu0 0.0
    %480 = vmatmul.mubr.f32.gmra.mxu0 %v390
    %v481 = vpop.f32.mrf.mxu0
    %v482 = vadd.f32 %v414, %v481
    %v483 = vpop.f32.mrf.mxu0
    %484 = vmatprep.mubr.f32.mxu0 0.0
    %485 = vmatmul.mubr.f32.gmra.mxu0 %v392
    %v486 = vpop.f32.mrf.mxu0
    %v487 = vadd.f32 %v414, %v486
    %v488 = vpop.f32.mrf.mxu0
    %489 = vdwg.mxu0
    %v490 = vxor.u32 %v482, 2147483648
    %v491 = vxor.u32 %v487, 2147483648
    %v492 = vmul.f32 %v490, 1.442695
    %v493 = vpow.pop %v492
    %v494 = vmul.f32 %v491, 1.442695
    %v495 = vpow.pop %v494
    %v496 = vadd.f32 %v493, 1.0
    %v497 = vadd.f32 %v495, 1.0
    %v498 = vrcp.pop %v496
    %v499 = vmul.f32 1.0, %v498
    %v500 = vrcp.pop %v497
    %v501 = vmul.f32 1.0, %v500
    %s502 = scalar_lea.vmem [#allocation7], 256
    %v503 = vld [vmem:[%s502] sm:$0xff]
    %v504 = vld [vmem:[%s502 + $0x8] sm:$0xff]
    %v505 = vld [vmem:[%s502 + $0x10] sm:$0xff]
    %v506 = vld [vmem:[%s502 + $0x18] sm:$0xff]
    %v507 = vld [vmem:[%s502 + $0x20] sm:$0xff]
    %v508 = vld [vmem:[%s502 + $0x28] sm:$0xff]
    %v509 = vld [vmem:[%s502 + $0x30] sm:$0xff]
    %v510 = vld [vmem:[%s502 + $0x38] sm:$0xff]
    %v511 = vld [vmem:[%s502 + $0x40] sm:$0xff]
    %v512 = vld [vmem:[%s502 + $0x48] sm:$0xff]
    %v513 = vld [vmem:[%s502 + $0x50] sm:$0xff]
    %v514 = vld [vmem:[%s502 + $0x58] sm:$0xff]
    %v515 = vld [vmem:[%s502 + $0x60] sm:$0xff]
    %v516 = vld [vmem:[%s502 + $0x68] sm:$0xff]
    %v517 = vld [vmem:[%s502 + $0x70] sm:$0xff]
    %v518 = vld [vmem:[%s502 + $0x78] sm:$0xff]
    %519 = vmatprep.subr.mxu0 0.0
    %520 = vmatpush1.msra.mxu0 %v518
    %521 = vmatprep.subr.mxu0 0.0
    %522 = vmatpush1.msra.mxu0 %v517
    %523 = vmatprep.subr.mxu0 0.0
    %524 = vmatpush1.msra.mxu0 %v516
    %525 = vmatprep.subr.mxu0 0.0
    %526 = vmatpush1.msra.mxu0 %v515
    %527 = vmatprep.subr.mxu0 0.0
    %528 = vmatpush1.msra.mxu0 %v514
    %529 = vmatprep.subr.mxu0 0.0
    %530 = vmatpush1.msra.mxu0 %v513
    %531 = vmatprep.subr.mxu0 0.0
    %532 = vmatpush1.msra.mxu0 %v512
    %533 = vmatprep.subr.mxu0 0.0
    %534 = vmatpush1.msra.mxu0 %v511
    %535 = vmatprep.subr.mxu0 0.0
    %536 = vmatpush1.msra.mxu0 %v510
    %537 = vmatprep.subr.mxu0 0.0
    %538 = vmatpush1.msra.mxu0 %v509
    %539 = vmatprep.subr.mxu0 0.0
    %540 = vmatpush1.msra.mxu0 %v508
    %541 = vmatprep.subr.mxu0 0.0
    %542 = vmatpush1.msra.mxu0 %v507
    %543 = vmatprep.subr.mxu0 0.0
    %544 = vmatpush1.msra.mxu0 %v506
    %545 = vmatprep.subr.mxu0 0.0
    %546 = vmatpush1.msra.mxu0 %v505
    %547 = vmatprep.subr.mxu0 0.0
    %548 = vmatpush1.msra.mxu0 %v504
    %549 = vmatprep.subr.mxu0 0.0
    %550 = vmatpush1.msra.mxu0 %v503
    %551 = vmatprep.subr.mxu0 0.0
    %552 = vmatpush2.msra.mxu0 0.0
    %553 = vmatprep.subr.mxu0 0.0
    %554 = vmatpush2.msra.mxu0 0.0
    %555 = vmatprep.subr.mxu0 0.0
    %556 = vmatpush2.msra.mxu0 0.0
    %557 = vmatprep.subr.mxu0 0.0
    %558 = vmatpush2.msra.mxu0 0.0
    %559 = vmatprep.subr.mxu0 0.0
    %560 = vmatpush2.msra.mxu0 0.0
    %561 = vmatprep.subr.mxu0 0.0
    %562 = vmatpush2.msra.mxu0 0.0
    %563 = vmatprep.subr.mxu0 0.0
    %564 = vmatpush2.msra.mxu0 0.0
    %565 = vmatprep.subr.mxu0 0.0
    %566 = vmatpush2.msra.mxu0 0.0
    %567 = vmatprep.subr.mxu0 0.0
    %568 = vmatpush2.msra.mxu0 0.0
    %569 = vmatprep.subr.mxu0 0.0
    %570 = vmatpush2.msra.mxu0 0.0
    %571 = vmatprep.subr.mxu0 0.0
    %572 = vmatpush2.msra.mxu0 0.0
    %573 = vmatprep.subr.mxu0 0.0
    %574 = vmatpush2.msra.mxu0 0.0
    %575 = vmatprep.subr.mxu0 0.0
    %576 = vmatpush2.msra.mxu0 0.0
    %577 = vmatprep.subr.mxu0 0.0
    %578 = vmatpush2.msra.mxu0 0.0
    %579 = vmatprep.subr.mxu0 0.0
    %580 = vmatpush2.msra.mxu0 0.0
    %581 = vmatprep.subr.mxu0 0.0
    %582 = vmatpush2.msra.mxu0 0.0
    %583 = vmatprep.mubr.f32.mxu0 0.0
    %584 = vmatmul.mubr.f32.gmra.mxu0 %v270
    %v585 = vpop.f32.mrf.mxu0
    %v586 = vadd.f32 0.0, %v585
    %v587 = vpop.f32.mrf.mxu0
    %588 = vmatprep.mubr.f32.mxu0 0.0
    %589 = vmatmul.mubr.f32.gmra.mxu0 %v272
    %v590 = vpop.f32.mrf.mxu0
    %v591 = vadd.f32 0.0, %v590
    %v592 = vpop.f32.mrf.mxu0
    %593 = vdwg.mxu0
    %v594 = vadd.f32 %v176, %v586
    %v595 = vadd.f32 %v182, %v591
    %s596 = scalar_lea.vmem [#allocation7], 384
    %v597 = vld [vmem:[%s596] sm:$0xff]
    %v598 = vld [vmem:[%s596 + $0x8] sm:$0xff]
    %v599 = vld [vmem:[%s596 + $0x10] sm:$0xff]
    %v600 = vld [vmem:[%s596 + $0x18] sm:$0xff]
    %v601 = vld [vmem:[%s596 + $0x20] sm:$0xff]
    %v602 = vld [vmem:[%s596 + $0x28] sm:$0xff]
    %v603 = vld [vmem:[%s596 + $0x30] sm:$0xff]
    %v604 = vld [vmem:[%s596 + $0x38] sm:$0xff]
    %v605 = vld [vmem:[%s596 + $0x40] sm:$0xff]
    %v606 = vld [vmem:[%s596 + $0x48] sm:$0xff]
    %v607 = vld [vmem:[%s596 + $0x50] sm:$0xff]
    %v608 = vld [vmem:[%s596 + $0x58] sm:$0xff]
    %v609 = vld [vmem:[%s596 + $0x60] sm:$0xff]
    %v610 = vld [vmem:[%s596 + $0x68] sm:$0xff]
    %v611 = vld [vmem:[%s596 + $0x70] sm:$0xff]
    %v612 = vld [vmem:[%s596 + $0x78] sm:$0xff]
    %613 = vmatprep.subr.mxu0 0.0
    %614 = vmatpush1.msra.mxu0 %v612
    %615 = vmatprep.subr.mxu0 0.0
    %616 = vmatpush1.msra.mxu0 %v611
    %617 = vmatprep.subr.mxu0 0.0
    %618 = vmatpush1.msra.mxu0 %v610
    %619 = vmatprep.subr.mxu0 0.0
    %620 = vmatpush1.msra.mxu0 %v609
    %621 = vmatprep.subr.mxu0 0.0
    %622 = vmatpush1.msra.mxu0 %v608
    %623 = vmatprep.subr.mxu0 0.0
    %624 = vmatpush1.msra.mxu0 %v607
    %625 = vmatprep.subr.mxu0 0.0
    %626 = vmatpush1.msra.mxu0 %v606
    %627 = vmatprep.subr.mxu0 0.0
    %628 = vmatpush1.msra.mxu0 %v605
    %629 = vmatprep.subr.mxu0 0.0
    %630 = vmatpush1.msra.mxu0 %v604
    %631 = vmatprep.subr.mxu0 0.0
    %632 = vmatpush1.msra.mxu0 %v603
    %633 = vmatprep.subr.mxu0 0.0
    %634 = vmatpush1.msra.mxu0 %v602
    %635 = vmatprep.subr.mxu0 0.0
    %636 = vmatpush1.msra.mxu0 %v601
    %637 = vmatprep.subr.mxu0 0.0
    %638 = vmatpush1.msra.mxu0 %v600
    %639 = vmatprep.subr.mxu0 0.0
    %640 = vmatpush1.msra.mxu0 %v599
    %641 = vmatprep.subr.mxu0 0.0
    %642 = vmatpush1.msra.mxu0 %v598
    %643 = vmatprep.subr.mxu0 0.0
    %644 = vmatpush1.msra.mxu0 %v597
    %645 = vmatprep.subr.mxu0 0.0
    %646 = vmatpush2.msra.mxu0 0.0
    %647 = vmatprep.subr.mxu0 0.0
    %648 = vmatpush2.msra.mxu0 0.0
    %649 = vmatprep.subr.mxu0 0.0
    %650 = vmatpush2.msra.mxu0 0.0
    %651 = vmatprep.subr.mxu0 0.0
    %652 = vmatpush2.msra.mxu0 0.0
    %653 = vmatprep.subr.mxu0 0.0
    %654 = vmatpush2.msra.mxu0 0.0
    %655 = vmatprep.subr.mxu0 0.0
    %656 = vmatpush2.msra.mxu0 0.0
    %657 = vmatprep.subr.mxu0 0.0
    %658 = vmatpush2.msra.mxu0 0.0
    %659 = vmatprep.subr.mxu0 0.0
    %660 = vmatpush2.msra.mxu0 0.0
    %661 = vmatprep.subr.mxu0 0.0
    %662 = vmatpush2.msra.mxu0 0.0
    %663 = vmatprep.subr.mxu0 0.0
    %664 = vmatpush2.msra.mxu0 0.0
    %665 = vmatprep.subr.mxu0 0.0
    %666 = vmatpush2.msra.mxu0 0.0
    %667 = vmatprep.subr.mxu0 0.0
    %668 = vmatpush2.msra.mxu0 0.0
    %669 = vmatprep.subr.mxu0 0.0
    %670 = vmatpush2.msra.mxu0 0.0
    %671 = vmatprep.subr.mxu0 0.0
    %672 = vmatpush2.msra.mxu0 0.0
    %673 = vmatprep.subr.mxu0 0.0
    %674 = vmatpush2.msra.mxu0 0.0
    %675 = vmatprep.subr.mxu0 0.0
    %676 = vmatpush2.msra.mxu0 0.0
    %677 = vmatprep.mubr.f32.mxu0 0.0
    %678 = vmatmul.mubr.f32.gmra.mxu0 %v499
    %v679 = vpop.f32.mrf.mxu0
    %v680 = vadd.f32 0.0, %v679
    %v681 = vpop.f32.mrf.mxu0
    %682 = vmatprep.mubr.f32.mxu0 0.0
    %683 = vmatmul.mubr.f32.gmra.mxu0 %v501
    %v684 = vpop.f32.mrf.mxu0
    %v685 = vadd.f32 0.0, %v684
    %v686 = vpop.f32.mrf.mxu0
    %687 = vdwg.mxu0
    %v688 = vadd.f32 %v594, %v680
    %v689 = vadd.f32 %v595, %v685
    %v690 = vld [vmem:[#allocation8 + $0x3] sm:$0x1]
    %v691 = vlaneseq
    %v692 = vshrl.u32 %v691, 7
    %v693 = vsub.s32 0, %v692
    %v694 = vrot.slane %v690, %v693
    %v695 = vadd.f32 %v688, %v694
    %v696 = vadd.f32 %v689, %v694
    %v697 = vlaneseq
    %v698 = vand.u32 %v697, 127
    %vm699 = vcmp.ge.s32.totalorder %v698, 5
    %vm700 = vcmp.lt.s32.totalorder %v698, 12
    %vm701 = vmand %vm699, %vm700
    %v702 = vxor.u32 %v695, 2147483648
    %v703 = vxor.u32 %v696, 2147483648
    %v704 = vmul.f32 %v702, 1.442695
    %v705 = vpow.pop %v704
    %v706 = vmul.f32 %v703, 1.442695
    %v707 = vpow.pop %v706
    %v708 = vadd.f32 %v705, 1.0
    %v709 = vadd.f32 %v707, 1.0
    %v710 = vrcp.pop %v708
    %v711 = vmul.f32 1.0, %v710
    %v712 = vrcp.pop %v709
    %v713 = vmul.f32 1.0, %v712
    %v714 = vsel %vm701, %v711, %v695
    %v715 = vsel %vm701, %v713, %v696
    %716 = vst [vmem:[#allocation10] sm:$0xff] %v714
    %717 = vst [vmem:[#allocation10 + $0x8] sm:$0xff] %v715
    // Predicated region
    $region34: #{tpu_custom_call.1} parent=1 // pred_check
      _
    $region35: #{tpu_custom_call.1} parent=1 // pred_check_branch
      %719 = sbr.rel (0) target = $region37
    $region36: #{tpu_custom_call.1} parent=1 // pred_region
      %s721 = ssub.s32 256, 256
      %722 = vsyncadd [#allocation4], %s721
      %s723 = sshll.u32 [#allocation10], 4
      %s724 = int_to_ptr.vmem [resolvable:$true] %s723
      %729 = dma.vmem_to_hbm [thread:$0]  %s724, 256, %s4, [#allocation4], 128, 128, 8
    $region37: #{tpu_custom_call.1} parent=1 // pred_fallthru
      _
    // Predicated region
    $region38: #{tpu_custom_call.1} parent=1 // pred_check
      _
    $region39: #{tpu_custom_call.1} parent=1 // pred_check_branch
      %731 = sbr.rel (0) target = $region41
    $region40: #{tpu_custom_call.1} parent=1 // pred_region
      %732 = dma.done [#allocation4], 256
    $region41: #{tpu_custom_call.1} parent=1 // pred_fallthru
      _
    %733 = vsyncpa [#allocation3], 1
    %734 = vsyncpa [#allocation6], 1
    %735 = vsyncpa [#allocation9], 1
    %736 = vsyncpa [#allocation4], 1

</llo_original>
